<compile_context>
chip_gen: v6e
topology: v6e:2x2x1
jax: 0.10.0
libtpu: 0.0.40
codegen_flags: <defaults>
</compile_context>

<pallas_src>
import functools
import math

import jax
import jax.numpy as jnp
from jax.experimental import pallas as pl
from jax.experimental.pallas import tpu as pltpu


def _conv_down_kernel(x_ref, w_ref, b_ref, o_ref, rhs_ref, *, wo1p, l_blk, c4):
    # x_ref  : (1, 1, 2, 2C, S_blk)  phase-split, rows+cols flattened on lanes
    # w_ref  : (C_out, 16C)          all 16 taps folded into the contraction
    # b_ref  : (C_out, 1)
    # o_ref  : (1, C_out, L_blk)     L_blk = TR*Wo1_pad, multiple of 128
    # rhs_ref: (16C, L_blk) VMEM scratch holding the 4 shifted slabs
    for t in range(4):                                  # unrolled, static slices
        dh, dw = t >> 1, t & 1
        start = dh * wo1p + dw
        slab = x_ref[0, 0, :, :, pl.ds(start, l_blk)]   # (2, 2C, L_blk)
        rhs_ref[pl.ds(t * c4, c4), :] = slab.reshape(c4, l_blk)
    acc = jnp.dot(w_ref[...], rhs_ref[...],
                  preferred_element_type=jnp.float32)   # single K=16C GEMM
    o_ref[0] = (acc + b_ref[...]).astype(o_ref.dtype)


def _pick_row_block(ho):
    # Row-block size: prefer a multiple of 8 (clean sublane tiling); otherwise
    # fall back to a single block covering the whole height.
    for tr in (16, 8):
        if ho % tr == 0:
            return tr
    return ho


def conv_down(x_nchw, weight, bias, *, compute_dtype=jnp.bfloat16):
    """Conv2d(c_in, c_out, kernel=(4,4), stride=(2,2), padding=(1,1)), NCHW."""
    N, C, H, W = x_nchw.shape
    C_out, C_in, KH, KW = weight.shape
    assert (C_in, KH, KW) == (C, 4, 4)
    assert H % 2 == 0 and W % 2 == 0, "even spatial dims expected"
    # TODO(synk): odd H/W (legal for k=4 s=2 p=1) would need edge handling.

    Ho, Wo = H // 2, W // 2
    Wo1 = Wo + 1                          # need column w'+1 for the dw=1 taps
    TR = _pick_row_block(Ho)              # output rows per grid step
    Rb = Ho // TR
    lane_unit = 128 // math.gcd(TR, 128)
    Wo1p = pl.cdiv(Wo1, lane_unit) * lane_unit   # padded row width
    L_blk = TR * Wo1p                     # GEMM lane dim, multiple of 128
    S_blk = (TR + 2) * Wo1p               # per-block flattened extent (2-row halo)
    C2 = 2 * C
    C4 = 4 * C

    # ---- glue: pad + phase split + per-block halo duplication --------------
    # x5[n, ph, pw*C+c, row, col] = x_padded[n, c, 2*row+ph, 2*col+pw]
    xp = jnp.pad(x_nchw, ((0, 0), (0, 0), (1, 3), (1, 2 * Wo1p - W - 1)))
    xr = xp.reshape(N, C, Ho + 2, 2, Wo1p, 2)                  # n,c,row,ph,col,pw
    x5 = jnp.transpose(xr, (0, 3, 5, 1, 2, 4)).reshape(N, 2, C2, Ho + 2, Wo1p)
    row_idx = jnp.arange(Rb)[:, None] * TR + jnp.arange(TR + 2)[None, :]
    xb = jnp.transpose(x5[:, :, :, row_idx, :], (0, 3, 1, 2, 4, 5))
    xb = xb.reshape(N, Rb, 2, C2, S_blk).astype(compute_dtype)

    # weight (C_out,C,4,4) -> (C_out, 16C); K-order = (dh, dw, ph, pw, c)
    wr = weight.reshape(C_out, C, 2, 2, 2, 2)                  # co,c,dh,ph,dw,pw
    w16 = jnp.transpose(wr, (0, 2, 4, 3, 5, 1)).reshape(C_out, 4 * C4)
    w16 = w16.astype(compute_dtype)
    b2 = bias.reshape(C_out, 1).astype(jnp.float32)

    kernel = functools.partial(_conv_down_kernel, wo1p=Wo1p, l_blk=L_blk, c4=C4)

    out_dtype = x_nchw.dtype
    flops = 2 * N * Rb * C_out * (4 * C4) * L_blk
    bytes_accessed = (xb.size * xb.dtype.itemsize
                      + w16.size * w16.dtype.itemsize
                      + b2.size * 4
                      + N * C_out * Rb * L_blk * x_nchw.dtype.itemsize)

    out = pl.pallas_call(
        kernel,
        out_shape=jax.ShapeDtypeStruct((N, C_out, Rb * L_blk), out_dtype),
        grid_spec=pltpu.PrefetchScalarGridSpec(
            num_scalar_prefetch=0,
            grid=(N, Rb),
            in_specs=[
                # one row-block (with halo) per grid step
                pl.BlockSpec((1, 1, 2, C2, S_blk),
                             lambda n, rb: (n, rb, 0, 0, 0)),
                # weights / bias: constant index_map -> fetched once, resident
                pl.BlockSpec((C_out, 4 * C4), lambda n, rb: (0, 0)),
                pl.BlockSpec((C_out, 1), lambda n, rb: (0, 0)),
            ],
            out_specs=pl.BlockSpec((1, C_out, L_blk), lambda n, rb: (n, 0, rb)),
            scratch_shapes=[pltpu.VMEM((4 * C4, L_blk), compute_dtype)],
        ),
        compiler_params=pltpu.CompilerParams(
            dimension_semantics=("parallel", "parallel"),
            # Safe on all current generations; re-derive (<= ~48 MiB) for
            # production shapes on v7x's 64 MiB physical VMEM.
            vmem_limit_bytes=32 * 1024 * 1024),
        cost_estimate=pl.CostEstimate(
            flops=flops, transcendentals=0, bytes_accessed=bytes_accessed),
    )(xb, w16, b2)

    # (N, C_out, Ho*Wo1p) is already NCHW-ordered; drop the junk pad columns.
    return out.reshape(N, C_out, Ho, Wo1p)[:, :, :, :Wo]


if __name__ == "__main__":
    key = jax.random.PRNGKey(0)
    kx, kw, kb = jax.random.split(key, 3)

    N, C_in, H, W = 2, 4, 16, 16
    C_out, KH, KW = 8, 4, 4

    x = jax.random.normal(kx, (N, C_in, H, W), dtype=jnp.float32)

    # Deterministic synthetic params (PyTorch-style uniform fan_in bound).
    fan_in = C_in * KH * KW
    bound = 1.0 / (fan_in ** 0.5)
    weight = jax.random.uniform(kw, (C_out, C_in, KH, KW), jnp.float32,
                                minval=-bound, maxval=bound)
    bias = jax.random.uniform(kb, (C_out,), jnp.float32,
                              minval=-bound, maxval=bound)

    y = jax.jit(conv_down)(x, weight, bias)
    y = jax.block_until_ready(y)

    # Reference: XLA conv on the same bf16-quantized inputs (kernel computes
    # bf16 x bf16 with f32 accumulation), f32 bias add.
    xq = x.astype(jnp.bfloat16).astype(jnp.float32)
    wq = weight.astype(jnp.bfloat16).astype(jnp.float32)
    ref = jax.lax.conv_general_dilated(
        xq, wq, window_strides=(2, 2), padding=((1, 1), (1, 1)),
        dimension_numbers=("NCHW", "OIHW", "NCHW"),
        precision=jax.lax.Precision.HIGHEST) + bias[None, :, None, None]

    assert y.shape == (N, C_out, H // 2, W // 2), y.shape
    err = float(jnp.max(jnp.abs(y - ref)))
    assert jnp.allclose(y, ref, rtol=5e-3, atol=5e-3), err
    print("KERNEL_OK")
</pallas_src>

<mosaic_0001>
module attributes {stable_mosaic.version = 11 : i64} {
  func.func @_conv_down_kernel(%arg0: i32, %arg1: i32, %arg2: memref<1x1x2x8x160xbf16, #tpu.memory_space<vmem>>, %arg3: memref<8x64xbf16, #tpu.memory_space<vmem>>, %arg4: memref<8x1xf32, #tpu.memory_space<vmem>>, %arg5: memref<1x8x128xf32, #tpu.memory_space<vmem>>, %arg6: memref<64x128xbf16, #tpu.memory_space<vmem>>) attributes {dimension_semantics = [#tpu.dimension_semantics<parallel>, #tpu.dimension_semantics<parallel>], iteration_bounds = array<i64: 2, 1>, scalar_prefetch = 0 : i64, scratch_operands = 1 : i64, tpu.core_type = #tpu.core_type<tc>, window_params = [{transform_indices = @transform_0, window_bounds = array<i64: 1, 1, 2, 8, 160>}, {pipeline_mode = #tpu.pipeline_mode<synchronous>, transform_indices = @transform_1, window_bounds = array<i64: 8, 64>}, {pipeline_mode = #tpu.pipeline_mode<synchronous>, transform_indices = @transform_2, window_bounds = array<i64: 8, 1>}, {transform_indices = @transform_3, window_bounds = array<i64: 1, 8, 128>}]} {
    %c0 = arith.constant 0 : index
    %c0_0 = arith.constant 0 : index
    %c0_1 = arith.constant 0 : index
    %c0_2 = arith.constant 0 : index
    %c0_3 = arith.constant 0 : index
    %0 = vector.load %arg2[%c0, %c0_0, %c0_1, %c0_2, %c0_3] : memref<1x1x2x8x160xbf16, #tpu.memory_space<vmem>>, vector<1x1x2x8x128xbf16>
    %1 = vector.shape_cast %0 : vector<1x1x2x8x128xbf16> to vector<2x8x128xbf16>
    %2 = vector.shape_cast %1 : vector<2x8x128xbf16> to vector<16x128xbf16>
    %c0_4 = arith.constant 0 : index
    %c0_5 = arith.constant 0 : index
    %3 = vector.load %arg6[%c0_4, %c0_5] : memref<64x128xbf16, #tpu.memory_space<vmem>>, vector<16x128xbf16>
    tpu.vector_store %arg6[%c0_4, %c0_5], %2 {strides = array<i32>} : memref<64x128xbf16, #tpu.memory_space<vmem>>, vector<16x128xbf16>,
    %c0_6 = arith.constant 0 : index
    %c0_7 = arith.constant 0 : index
    %c0_8 = arith.constant 0 : index
    %c0_9 = arith.constant 0 : index
    %c1 = arith.constant 1 : index
    %4 = vector.load %arg2[%c0_6, %c0_7, %c0_8, %c0_9, %c1] : memref<1x1x2x8x160xbf16, #tpu.memory_space<vmem>>, vector<1x1x2x8x128xbf16>
    %5 = vector.shape_cast %4 : vector<1x1x2x8x128xbf16> to vector<2x8x128xbf16>
    %6 = vector.shape_cast %5 : vector<2x8x128xbf16> to vector<16x128xbf16>
    %c16 = arith.constant 16 : index
    %c0_10 = arith.constant 0 : index
    %7 = vector.load %arg6[%c16, %c0_10] : memref<64x128xbf16, #tpu.memory_space<vmem>>, vector<16x128xbf16>
    tpu.vector_store %arg6[%c16, %c0_10], %6 {strides = array<i32>} : memref<64x128xbf16, #tpu.memory_space<vmem>>, vector<16x128xbf16>,
    %c0_11 = arith.constant 0 : index
    %c0_12 = arith.constant 0 : index
    %c0_13 = arith.constant 0 : index
    %c0_14 = arith.constant 0 : index
    %c16_15 = arith.constant 16 : index
    %8 = vector.load %arg2[%c0_11, %c0_12, %c0_13, %c0_14, %c16_15] : memref<1x1x2x8x160xbf16, #tpu.memory_space<vmem>>, vector<1x1x2x8x128xbf16>
    %9 = vector.shape_cast %8 : vector<1x1x2x8x128xbf16> to vector<2x8x128xbf16>
    %10 = vector.shape_cast %9 : vector<2x8x128xbf16> to vector<16x128xbf16>
    %c32 = arith.constant 32 : index
    %c0_16 = arith.constant 0 : index
    %11 = vector.load %arg6[%c32, %c0_16] : memref<64x128xbf16, #tpu.memory_space<vmem>>, vector<16x128xbf16>
    tpu.vector_store %arg6[%c32, %c0_16], %10 {strides = array<i32>} : memref<64x128xbf16, #tpu.memory_space<vmem>>, vector<16x128xbf16>,
    %c0_17 = arith.constant 0 : index
    %c0_18 = arith.constant 0 : index
    %c0_19 = arith.constant 0 : index
    %c0_20 = arith.constant 0 : index
    %c17 = arith.constant 17 : index
    %12 = vector.load %arg2[%c0_17, %c0_18, %c0_19, %c0_20, %c17] : memref<1x1x2x8x160xbf16, #tpu.memory_space<vmem>>, vector<1x1x2x8x128xbf16>
    %13 = vector.shape_cast %12 : vector<1x1x2x8x128xbf16> to vector<2x8x128xbf16>
    %14 = vector.shape_cast %13 : vector<2x8x128xbf16> to vector<16x128xbf16>
    %c48 = arith.constant 48 : index
    %c0_21 = arith.constant 0 : index
    %15 = vector.load %arg6[%c48, %c0_21] : memref<64x128xbf16, #tpu.memory_space<vmem>>, vector<16x128xbf16>
    tpu.vector_store %arg6[%c48, %c0_21], %14 {strides = array<i32>} : memref<64x128xbf16, #tpu.memory_space<vmem>>, vector<16x128xbf16>,
    %c0_22 = arith.constant 0 : index
    %c0_23 = arith.constant 0 : index
    %16 = vector.load %arg3[%c0_22, %c0_23] : memref<8x64xbf16, #tpu.memory_space<vmem>>, vector<8x64xbf16>
    %c0_24 = arith.constant 0 : index
    %c0_25 = arith.constant 0 : index
    %17 = vector.load %arg6[%c0_24, %c0_25] : memref<64x128xbf16, #tpu.memory_space<vmem>>, vector<64x128xbf16>
    %cst = arith.constant dense<0.000000e+00> : vector<8x128xf32>
    %18 = tpu.matmul %16, %17, %cst {dimension_numbers = #tpu.dot_dimension_numbers<[1], [0], [0], [1], [0, 0, 1, 1], [], []>} : vector<8x64xbf16>, vector<64x128xbf16>, vector<8x128xf32> -> vector<8x128xf32>
    %c0_26 = arith.constant 0 : index
    %c0_27 = arith.constant 0 : index
    %19 = vector.load %arg4[%c0_26, %c0_27] : memref<8x1xf32, #tpu.memory_space<vmem>>, vector<8x1xf32>
    %20 = vector.broadcast %19 : vector<8x1xf32> to vector<8x128xf32>
    %21 = arith.addf %18, %20 : vector<8x128xf32>
    %c0_28 = arith.constant 0 : index
    %c0_29 = arith.constant 0 : index
    %c0_30 = arith.constant 0 : index
    %22 = vector.load %arg5[%c0_28, %c0_29, %c0_30] : memref<1x8x128xf32, #tpu.memory_space<vmem>>, vector<1x8x128xf32>
    %23 = vector.shape_cast %22 : vector<1x8x128xf32> to vector<8x128xf32>
    %24 = vector.shape_cast %21 : vector<8x128xf32> to vector<1x8x128xf32>
    tpu.vector_store %arg5[%c0_28, %c0_29, %c0_30], %24 {strides = array<i32>} : memref<1x8x128xf32, #tpu.memory_space<vmem>>, vector<1x8x128xf32>,
    return
  }
  func.func @transform_0(%arg0: i32, %arg1: i32) -> (i32, i32, i32, i32, i32) {
    %c0_i32 = arith.constant 0 : i32
    %c0_i32_0 = arith.constant 0 : i32
    %c0_i32_1 = arith.constant 0 : i32
    %c0_i32_2 = arith.constant 0 : i32
    return %arg0, %arg1, %c0_i32, %c0_i32_0, %c0_i32_1 : i32, i32, i32, i32, i32
  }
  func.func @transform_1(%arg0: i32, %arg1: i32) -> (i32, i32) {
    %c0_i32 = arith.constant 0 : i32
    %c0_i32_0 = arith.constant 0 : i32
    %c0_i32_1 = arith.constant 0 : i32
    return %c0_i32, %c0_i32_0 : i32, i32
  }
  func.func @transform_2(%arg0: i32, %arg1: i32) -> (i32, i32) {
    %c0_i32 = arith.constant 0 : i32
    %c0_i32_0 = arith.constant 0 : i32
    %c0_i32_1 = arith.constant 0 : i32
    return %c0_i32, %c0_i32_0 : i32, i32
  }
  func.func @transform_3(%arg0: i32, %arg1: i32) -> (i32, i32, i32) {
    %c0_i32 = arith.constant 0 : i32
    %c0_i32_0 = arith.constant 0 : i32
    return %arg0, %c0_i32, %arg1 : i32, i32, i32
  }
}

</mosaic_0001>

<llo_original>
// kernel: conv_down.1
$region0: #{conv_down.1}
  #allocation0 [shape = 'u32[]', space=smem, size = 0x4, offset = 0x4, fixed_abs, tag = 'smem constant byte address 0x4 - core index']
  #allocation1 [shape = 'u32[144,128]{1,0:T(1,128)}', space=vmem, size = 0x12000, scoped, tag = 'internal scratch']
  #allocation2 [shape = 'bf16[64,128]{1,0:T(8,128)(2,1)}', space=vmem, size = 0x4000, scoped, tag = 'scratch operand']
  %s0 = inlined_call_operand.vmem [shape: bf16[2,1,2,8,160], index: 0, kind: input, shape index: {}]
  %s1 = inlined_call_operand.vmem [shape: bf16[8,64], index: 1, kind: input, shape index: {}]
  %s2 = inlined_call_operand.vmem [shape: f32[8,1], index: 2, kind: input, shape index: {}]
  %s3 = inlined_call_operand.vmem [shape: f32[2,8,128], index: 3, kind: output, shape index: {}]
  %s4 = sld [smem:[#allocation0]]
  $region45: #{conv_down.1} parent=0
    _
  %s6 = ssub.s32 1, %s4
  %s7 = scalar_select 0, %s6, %s4
  loop: start=0, step=1, limit=4
  $region2: #{conv_down.1} parent=0 // loop_pre_header
    _
  $region3: #{conv_down.1} parent=0 // loop_header
    %s9 = sphi 0, %s13
    %p10 = scmp.ge.s32.totalorder %s9, 4
    %s16 = sphi 0, %s28
    %s17 = sphi 0, %s24
    %s18 = sphi 0, %s16
    %s19 = sphi 0, %s17
    %s20 = sphi 0, %s18
    %s21 = sphi 0, %s19
    %s33 = sphi 0, %s35
    %s36 = sphi 0, %s33
    %s37 = sphi 0, %s36
    %s53 = sphi 0, %s37
    %s57 = sphi 0, %s57
    %s59 = sphi 0, %s57
    %s60 = sphi 0, %s59
    %s74 = sphi 0, %s60
    %s78 = sphi 0, %s78
    %s80 = sphi 0, %s78
    %s81 = sphi 0, %s80
    %s95 = sphi 0, %s81
    %s103 = sphi 0, %s105
    %s106 = sphi 0, %s103
    %s107 = sphi 0, %s106
    %s123 = sphi 0, %s107
  $region4: #{conv_down.1} parent=0 // loop_header_branch
    %12 = sbr.rel (%p10) target = $region8
  $region5: #{conv_down.1} parent=0 // loop_body
    %s14 = ssub.s32 %s9, 1
    %s15 = ssub.s32 %s9, 2
    %s22 = sadd.s32 1, %s17
    %p23 = scmp.ge.s32.totalorder %s22, 1
    %s24 = scalar_select %p23, 0, %s22
    %s25 = sadd.s32 1, %s16
    %s26 = scalar_select %p23, %s25, %s16
    %p27 = scmp.ge.s32.totalorder %s26, 2
    %s28 = scalar_select %p27, 0, %s26
    %s29 = ssub.s32 %s16, %s28
    %s30 = ssub.s32 %s17, %s24
    %s31 = sor.u32 %s29, %s30
    %p32 = scmp.eq.s32.totalorder %s31, 0
    %s34 = sadd.s32 %s33, 1
    %s35 = scalar_select %p32, %s33, %s34
    %p38 = pneg %p32
    %p39 = scmp.eq.s32.totalorder %s9, 1
    %p40 = por %p38, %p39
    %p41 = scmp.ne.s32.totalorder %s33, %s36
    %p42 = scmp.eq.s32.totalorder %s9, 0
    %p43 = por %p41, %p42
    %p44 = scmp.ne.s32.totalorder %s33, %s36
    %p45 = scmp.eq.s32.totalorder %s14, 1
    %p46 = por %p44, %p45
    %p47 = scmp.ne.s32.totalorder %s36, %s37
    %p48 = scmp.eq.s32.totalorder %s14, 0
    %p49 = por %p47, %p48
    %p50 = scmp.ne.s32.totalorder %s36, %s37
    %p51 = scmp.eq.s32.totalorder %s15, 1
    %p52 = por %p50, %p51
    %p54 = scmp.ne.s32.totalorder %s37, %s53
    %p55 = scmp.eq.s32.totalorder %s15, 0
    %p56 = por %p54, %p55
    %s58 = sadd.s32 %s57, 1
    %p61 = scmp.eq.s32.totalorder %s9, 1
    %p62 = scmp.ne.s32.totalorder %s57, %s59
    %p63 = scmp.eq.s32.totalorder %s9, 0
    %p64 = por %p62, %p63
    %p65 = scmp.ne.s32.totalorder %s57, %s59
    %p66 = scmp.eq.s32.totalorder %s14, 1
    %p67 = por %p65, %p66
    %p68 = scmp.ne.s32.totalorder %s59, %s60
    %p69 = scmp.eq.s32.totalorder %s14, 0
    %p70 = por %p68, %p69
    %p71 = scmp.ne.s32.totalorder %s59, %s60
    %p72 = scmp.eq.s32.totalorder %s15, 1
    %p73 = por %p71, %p72
    %p75 = scmp.ne.s32.totalorder %s60, %s74
    %p76 = scmp.eq.s32.totalorder %s15, 0
    %p77 = por %p75, %p76
    %s79 = sadd.s32 %s78, 1
    %p82 = scmp.eq.s32.totalorder %s9, 1
    %p83 = scmp.ne.s32.totalorder %s78, %s80
    %p84 = scmp.eq.s32.totalorder %s9, 0
    %p85 = por %p83, %p84
    %p86 = scmp.ne.s32.totalorder %s78, %s80
    %p87 = scmp.eq.s32.totalorder %s14, 1
    %p88 = por %p86, %p87
    %p89 = scmp.ne.s32.totalorder %s80, %s81
    %p90 = scmp.eq.s32.totalorder %s14, 0
    %p91 = por %p89, %p90
    %p92 = scmp.ne.s32.totalorder %s80, %s81
    %p93 = scmp.eq.s32.totalorder %s15, 1
    %p94 = por %p92, %p93
    %p96 = scmp.ne.s32.totalorder %s81, %s95
    %p97 = scmp.eq.s32.totalorder %s15, 0
    %p98 = por %p96, %p97
    %s99 = ssub.s32 %s16, %s28
    %s100 = ssub.s32 %s17, %s24
    %s101 = sor.u32 %s99, %s100
    %p102 = scmp.eq.s32.totalorder %s101, 0
    %s104 = sadd.s32 %s103, 1
    %s105 = scalar_select %p102, %s103, %s104
    %p108 = pneg %p102
    %p109 = scmp.eq.s32.totalorder %s9, 1
    %p110 = por %p108, %p109
    %p111 = scmp.ne.s32.totalorder %s103, %s106
    %p112 = scmp.eq.s32.totalorder %s9, 0
    %p113 = por %p111, %p112
    %p114 = scmp.ne.s32.totalorder %s103, %s106
    %p115 = scmp.eq.s32.totalorder %s14, 1
    %p116 = por %p114, %p115
    %p117 = scmp.ne.s32.totalorder %s106, %s107
    %p118 = scmp.eq.s32.totalorder %s14, 0
    %p119 = por %p117, %p118
    %p120 = scmp.ne.s32.totalorder %s106, %s107
    %p121 = scmp.eq.s32.totalorder %s15, 1
    %p122 = por %p120, %p121
    %p124 = scmp.ne.s32.totalorder %s107, %s123
    %p125 = scmp.eq.s32.totalorder %s15, 0
    %p126 = por %p124, %p125
    %p127 = scmp.le.s32.totalorder 1, %s9
    %p128 = scmp.lt.s32.totalorder %s9, 3
    %p129 = pnand %p127, %p128
    %p130 = pneg %p129
    // Predicated region
    $region9: #{conv_down.1} parent=5 // pred_check
      _
    $region10: #{conv_down.1} parent=5 // pred_check_branch
      %132 = sbr.rel (%p129) target = $region12
    $region11: #{conv_down.1} parent=5 // pred_region
      %s133 = ssub.s32 %s9, 1
      // Predicated region
      $region13: #{conv_down.1} parent=11 // pred_check
        %p134 = pneg %p70
      $region14: #{conv_down.1} parent=11 // pred_check_branch
        %136 = sbr.rel (%p134) target = $region16
      $region15: #{conv_down.1} parent=11 // pred_region
        _
      $region16: #{conv_down.1} parent=11 // pred_fallthru
        _
      // Predicated region
      $region17: #{conv_down.1} parent=11 // pred_check
        %p137 = pneg %p91
      $region18: #{conv_down.1} parent=11 // pred_check_branch
        %139 = sbr.rel (%p137) target = $region20
      $region19: #{conv_down.1} parent=11 // pred_region
        _
      $region20: #{conv_down.1} parent=11 // pred_fallthru
        _
    $region12: #{conv_down.1} parent=5 // pred_fallthru
      _
    %p140 = scmp.lt.s32.totalorder %s9, 2
    // Predicated region
    $region21: #{conv_down.1} parent=5 // pred_check
      %p141 = pneg %p140
    $region22: #{conv_down.1} parent=5 // pred_check_branch
      %143 = sbr.rel (%p141) target = $region24
    $region23: #{conv_down.1} parent=5 // pred_region
      // Predicated region
      $region25: #{conv_down.1} parent=23 // pred_check
        %p144 = pneg %p43
      $region26: #{conv_down.1} parent=23 // pred_check_branch
        %146 = sbr.rel (%p144) target = $region28
      $region27: #{conv_down.1} parent=23 // pred_region
        %p147 = scmp.lt.s32.totalorder %s16, 1
        %s148 = scalar_select %p147, %s16, 1
        %p149 = scmp.lt.s32.totalorder %s17, 0
        %s150 = scalar_select %p149, %s17, 0
        %s151 = smul.addr %s150, 4
        %s152 = smul.addr %s148, 4
        %s153 = sadd.s32 %s151, %s152
        %s154 = smul.addr %s153, 4
        %s155 = scalar_lea.vmem %s0, %s154
      $region28: #{conv_down.1} parent=23 // pred_fallthru
        _
    $region24: #{conv_down.1} parent=5 // pred_fallthru
      _
    %p156 = scmp.le.s32.totalorder 1, %s9
    %p157 = scmp.lt.s32.totalorder %s9, 3
    %p158 = pnand %p156, %p157
    %p159 = pneg %p158
    // Predicated region
    $region29: #{conv_down.1} parent=5 // pred_check
      _
    $region30: #{conv_down.1} parent=5 // pred_check_branch
      %161 = sbr.rel (%p158) target = $region32
    $region31: #{conv_down.1} parent=5 // pred_region
      %s162 = ssub.s32 %s9, 1
      %p163 = scmp.lt.s32.totalorder %s18, 1
      %s164 = scalar_select %p163, %s18, 1
      %p165 = scmp.lt.s32.totalorder %s19, 0
      %s166 = scalar_select %p165, %s19, 0
      %s167 = smul.addr %s166, 4
      %s168 = smul.addr %s164, 4
      %s169 = sadd.s32 %s167, %s168
      %s170 = smul.addr %s169, 4
      %s171 = scalar_lea.vmem %s0, %s170
      %p172 = pneg %p49
      %p173 = pneg %p46
      %p174 = pneg %p70
      %p175 = pneg %p67
      %p176 = pneg %p91
      %p177 = pneg %p88
      %p178 = pneg %p119
      %p179 = pneg %p116
      %p180 = scmp.lt.s32.totalorder %s18, 1
      %s181 = scalar_select %p180, %s18, 1
      %p182 = scmp.lt.s32.totalorder %s19, 0
      %s183 = scalar_select %p182, %s19, 0
      %s184 = sadd.s32 %s183, %s181
      %s185 = smul.addr %s184, 8
      %s186 = scalar_lea.vmem %s3, %s185
      %p187 = scmp.lt.s32.totalorder %s18, 1
      %s188 = scalar_select %p187, %s18, 1
      %p189 = scmp.lt.s32.totalorder %s19, 0
      %s190 = scalar_select %p189, %s19, 0
      %s191 = smul.addr %s190, 4
      %s192 = smul.addr %s188, 4
      %s193 = sadd.s32 %s191, %s192
      %s194 = smul.addr %s193, 4
      %s195 = scalar_lea.vmem %s0, %s194
      %p196 = scmp.lt.s32.totalorder %s18, 1
      %s197 = scalar_select %p196, %s18, 1
      %p198 = scmp.lt.s32.totalorder %s19, 0
      %s199 = scalar_select %p198, %s19, 0
      %s200 = sadd.s32 %s199, %s197
      %s201 = smul.addr %s200, 8
      %s202 = scalar_lea.vmem %s3, %s201
      %v204 = vld [vmem:[%s195] sm:$0xf]
      %v205 = vld [vmem:[%s195 + $0x8] sm:$0xf]
      %206 = vst [vmem:[#allocation2] sm:$0xf] %v204
      %207 = vst [vmem:[#allocation2 + $0x4] sm:$0xf] %v205
      %v208 = vld [vmem:[%s195] sm:$0xff]
      %v209 = vld [vmem:[%s195 + $0x8] sm:$0xff]
      %212 = vrot.lane.b32.xlu0 %v208, 127
      %v213 = vpop.permute.xlu0 %212
      %214 = vrot.lane.b32.xlu0 %v209, 127
      %v215 = vpop.permute.xlu0 %214
      %v216 = vrot.slane %v213, 4
      %v217 = vrot.slane %v215, 4
      %vm218 = vcmask 1039360
      %v219 = vsel %vm218, %v213, %v216
      %v220 = vsel %vm218, %v215, %v217
      %223 = vst [vmem:[#allocation2 + $0x8] sm:$0xf] %v219
      %224 = vst [vmem:[#allocation2 + $0xc] sm:$0xf] %v220
      %v225 = vld [vmem:[%s195] sm:$0xff]
      %v226 = vld [vmem:[%s195 + $0x8] sm:$0xff]
      %229 = vrot.lane.b32.xlu0 %v225, 112
      %v230 = vpop.permute.xlu0 %229
      %231 = vrot.lane.b32.xlu0 %v226, 112
      %v232 = vpop.permute.xlu0 %231
      %v233 = vrot.slane %v230, 4
      %v234 = vrot.slane %v232, 4
      %vm235 = vcmask 916480
      %v236 = vsel %vm235, %v230, %v233
      %v237 = vsel %vm235, %v232, %v234
      %240 = vst [vmem:[#allocation2 + $0x10] sm:$0xf] %v236
      %241 = vst [vmem:[#allocation2 + $0x14] sm:$0xf] %v237
      %v242 = vld [vmem:[%s195] sm:$0xff]
      %v243 = vld [vmem:[%s195 + $0x8] sm:$0xff]
      %246 = vrot.lane.b32.xlu0 %v242, 111
      %v247 = vpop.permute.xlu0 %246
      %248 = vrot.lane.b32.xlu0 %v243, 111
      %v249 = vpop.permute.xlu0 %248
      %v250 = vrot.slane %v247, 4
      %v251 = vrot.slane %v249, 4
      %vm252 = vcmask 908288
      %v253 = vsel %vm252, %v247, %v250
      %v254 = vsel %vm252, %v249, %v251
      %257 = vst [vmem:[#allocation2 + $0x18] sm:$0xf] %v253
      %258 = vst [vmem:[#allocation2 + $0x1c] sm:$0xf] %v254
      %v259 = vld [vmem:[%s1] sm:$0xf]
      %v260 = vld [vmem:[#allocation2] sm:$0xf]
      %v261 = vld [vmem:[#allocation2 + $0x4] sm:$0xf]
      %v262 = vld [vmem:[#allocation2 + $0x8] sm:$0xf]
      %v263 = vld [vmem:[#allocation2 + $0xc] sm:$0xf]
      %v264 = vld [vmem:[#allocation2 + $0x10] sm:$0xf]
      %v265 = vld [vmem:[#allocation2 + $0x14] sm:$0xf]
      %v266 = vld [vmem:[#allocation2 + $0x18] sm:$0xf]
      %v267 = vld [vmem:[#allocation2 + $0x1c] sm:$0xf]
      %v268 = vld [vmem:[%s2] sm:$0xff]
      %270 = vset.pattern.permute.xlu0 0
      %271 = vperm.xlu0 %270, %v268
      %v272 = vpop.permute.xlu0 %271
      %v282 = vunpack.c.l.b16 %v260
      %v283 = vunpack.c.l.b16 %v261
      %v284 = vunpack.c.l.b16 %v262
      %v285 = vunpack.c.l.b16 %v263
      %v286 = vunpack.c.l.b16 %v264
      %v287 = vunpack.c.l.b16 %v265
      %v288 = vunpack.c.l.b16 %v266
      %v289 = vunpack.c.l.b16 %v267
      %v290 = vpack.c.b16 %v283, %v282
      %v291 = vpack.c.b16 %v285, %v284
      %v292 = vpack.c.b16 %v287, %v286
      %v293 = vpack.c.b16 %v289, %v288
      %vm298 = vcmask 523264
      %v300 = vsel %vm298, %v259, 0
      %302 = vmatprep.subr.bf16.mxu0 0
      %303 = vmatpush1.bf16.msra.mxu0 0
      %304 = vmatprep.subr.bf16.mxu0 0
      %305 = vmatpush1.bf16.msra.mxu0 0
      %306 = vmatprep.subr.bf16.mxu0 0
      %307 = vmatpush1.bf16.msra.mxu0 0
      %308 = vmatprep.subr.bf16.mxu0 0
      %309 = vmatpush1.bf16.msra.mxu0 0
      %310 = vmatprep.subr.bf16.mxu0 0
      %311 = vmatpush1.bf16.msra.mxu0 %v293
      %312 = vmatprep.subr.bf16.mxu0 0
      %313 = vmatpush1.bf16.msra.mxu0 %v292
      %314 = vmatprep.subr.bf16.mxu0 0
      %315 = vmatpush1.bf16.msra.mxu0 %v291
      %316 = vmatprep.subr.bf16.mxu0 0
      %317 = vmatpush1.bf16.msra.mxu0 %v290
      %318 = vmatprep.subr.bf16.mxu0 0
      %319 = vmatpush2.bf16.msra.mxu0 0
      %320 = vmatprep.subr.bf16.mxu0 0
      %321 = vmatpush2.bf16.msra.mxu0 0
      %322 = vmatprep.subr.bf16.mxu0 0
      %323 = vmatpush2.bf16.msra.mxu0 0
      %324 = vmatprep.subr.bf16.mxu0 0
      %325 = vmatpush2.bf16.msra.mxu0 0
      %326 = vmatprep.subr.bf16.mxu0 0
      %327 = vmatpush2.bf16.msra.mxu0 0
      %328 = vmatprep.subr.bf16.mxu0 0
      %329 = vmatpush2.bf16.msra.mxu0 0
      %330 = vmatprep.subr.bf16.mxu0 0
      %331 = vmatpush2.bf16.msra.mxu0 0
      %332 = vmatprep.subr.bf16.mxu0 0
      %333 = vmatpush2.bf16.msra.mxu0 0
      %334 = vmatprep.mubr.bf16.mxu0 0
      %335 = vmatmul.mubr.bf16.gmra.mxu0 %v300
      %v336 = vpop.f32.mrf.mxu0
      %v337 = vadd.f32 %v272, %v336
      %v338 = vpop.f32.mrf.mxu0
      %v339 = vpop.f32.mrf.mxu0
      %v340 = vpop.f32.mrf.mxu0
      %341 = vdwg.mxu0
      %342 = vst [vmem:[%s202] sm:$0xff] %v337
      %p343 = scmp.lt.s32.totalorder %s18, 1
      %s344 = scalar_select %p343, %s18, 1
      %p345 = scmp.lt.s32.totalorder %s19, 0
      %s346 = scalar_select %p345, %s19, 0
      %s347 = sadd.s32 %s346, %s344
      %s348 = smul.addr %s347, 8
      %s349 = scalar_lea.vmem %s3, %s348
      // Predicated region
      $region33: #{conv_down.1} parent=31 // pred_check
        %p350 = pneg %p116
      $region34: #{conv_down.1} parent=31 // pred_check_branch
        %352 = sbr.rel (%p350) target = $region36
      $region35: #{conv_down.1} parent=31 // pred_region
        _
      $region36: #{conv_down.1} parent=31 // pred_fallthru
        _
    $region32: #{conv_down.1} parent=5 // pred_fallthru
      _
    %p353 = scmp.le.s32.totalorder 2, %s9
    // Predicated region
    $region37: #{conv_down.1} parent=5 // pred_check
      %p354 = pneg %p353
    $region38: #{conv_down.1} parent=5 // pred_check_branch
      %356 = sbr.rel (%p354) target = $region40
    $region39: #{conv_down.1} parent=5 // pred_region
      %s357 = ssub.s32 %s9, 2
      // Predicated region
      $region41: #{conv_down.1} parent=39 // pred_check
        %p358 = pneg %p122
      $region42: #{conv_down.1} parent=39 // pred_check_branch
        %360 = sbr.rel (%p358) target = $region44
      $region43: #{conv_down.1} parent=39 // pred_region
        %p361 = scmp.lt.s32.totalorder %s20, 1
        %s362 = scalar_select %p361, %s20, 1
        %p363 = scmp.lt.s32.totalorder %s21, 0
        %s364 = scalar_select %p363, %s21, 0
        %s365 = sadd.s32 %s364, %s362
        %s366 = smul.addr %s365, 8
        %s367 = scalar_lea.vmem %s3, %s366
      $region44: #{conv_down.1} parent=39 // pred_fallthru
        _
    $region40: #{conv_down.1} parent=5 // pred_fallthru
      _
  $region6: #{conv_down.1} parent=0 // loop_footer
    %s13 = sadd.s32 1, %s9
  $region7: #{conv_down.1} parent=0 // loop_footer_branch
    %8 = sbr.rel target = $region3
  $region8: #{conv_down.1} parent=0 // loop_exit
    _

</llo_original>
